<compile_context>
chip_gen: v5e
topology: v5e:2x2
jax: 0.10.0
libtpu: 0.0.40
codegen_flags: <defaults>
</compile_context>

<pallas_src>
import functools

import jax
import jax.numpy as jnp
import numpy as np
from jax.experimental import pallas as pl
from jax.experimental.pallas import tpu as pltpu


def _scale_embedding_kernel(x_ref, wj_ref, bj_ref, wf_ref, bf_ref, vt_ref, o_ref,
                            *, n_join_col, n_fanout, hist_dim, n_embd):
    # x_ref  : (bt, (Nj+Nf)*H)  raw feature rows for this batch tile
    # wj_ref : (H, E)           folded join weights   (W[1:] + W[0:1])
    # bj_ref : (1, E)           join bias
    # wf_ref : (H, E)           folded fanout weights
    # bf_ref : (1, E)           fanout bias
    # vt_ref : (1, E)           virtual-token embedding row (index 1)
    # o_ref  : (bt, T*E)        final layout, T = 1 + Nj + Nf
    H, E = hist_dim, n_embd
    bt = x_ref.shape[0]

    # Hoist resident weight / bias loads out of the per-token loops.
    wj = wj_ref[...]
    wf = wf_ref[...]
    bj = bj_ref[...].astype(jnp.float32)
    bf = bf_ref[...].astype(jnp.float32)

    # Token 0: input-independent virtual-token embedding.
    o_ref[:, 0:E] = jnp.broadcast_to(vt_ref[...], (bt, E)).astype(o_ref.dtype)

    # Join-column tokens: sum(hist) column is folded into wj, so each token is
    # one small MXU matmul + bias, stored at a 128-lane-aligned offset.
    for t in range(n_join_col):
        xs = x_ref[:, t * H:(t + 1) * H]                               # (bt, H)
        h = jnp.dot(xs, wj, preferred_element_type=jnp.float32) + bj   # (bt, E)
        o_ref[:, (1 + t) * E:(2 + t) * E] = h.astype(o_ref.dtype)

    # Fanout tokens.
    base = n_join_col * H
    obase = (1 + n_join_col) * E
    for t in range(n_fanout):
        xs = x_ref[:, base + t * H:base + (t + 1) * H]                 # (bt, H)
        h = jnp.dot(xs, wf, preferred_element_type=jnp.float32) + bf   # (bt, E)
        o_ref[:, obase + t * E:obase + (t + 1) * E] = h.astype(o_ref.dtype)


def _pick_batch_tile(B, feat_dim, out_lanes, max_block_bytes=4 * 1024 * 1024):
    """Largest divisor d of B with d % 8 == 0 (TPU (8,128) block rule) whose
    f32 input+output block fits a modest VMEM budget.  d == B is always legal
    (block equals the full array extent), used as fallback."""
    row_bytes = 4 * (feat_dim + out_lanes)
    cap = max(1, max_block_bytes // row_bytes)
    best = None
    for d in range(1, B + 1):
        if B % d:
            continue
        if d > cap:
            continue
        if d % 8 == 0 or d == B:
            best = d
    return best if best is not None else B   # fallback: single grid step


def scale_embedding(x, params, *, n_join_col, n_fanout, hist_dim, n_embd,
                    batch_tile=None, compute_dtype=jnp.float32):
    B, F = x.shape
    Nj, Nf, H, E = n_join_col, n_fanout, hist_dim, n_embd
    T = 1 + Nj + Nf
    assert F == (Nj + Nf) * H, "feature dim must be (n_join_col+n_fanout)*hist_dim"

    # Fold the sum(hist) column into the histogram weights (host-side, tiny).
    wj_eff = (params['wj'][1:] + params['wj'][0:1]).astype(compute_dtype)   # (H, E)
    wf_eff = (params['wf'][1:] + params['wf'][0:1]).astype(compute_dtype)   # (H, E)
    bj = params['bj'].reshape(1, E).astype(jnp.float32)
    bf = params['bf'].reshape(1, E).astype(jnp.float32)
    vt = params['emb'][1].reshape(1, E).astype(jnp.float32)
    xin = x.astype(compute_dtype)

    bt = batch_tile if batch_tile is not None else _pick_batch_tile(B, F, T * E)
    assert B % bt == 0, "batch_tile must divide batch"
    assert bt % 8 == 0 or bt == B, "batch_tile must be a multiple of 8 (or == batch)"
    grid = (B // bt,)

    kernel = functools.partial(_scale_embedding_kernel, n_join_col=Nj,
                               n_fanout=Nf, hist_dim=H, n_embd=E)

    out2d = pl.pallas_call(
        kernel,
        out_shape=jax.ShapeDtypeStruct((B, T * E), jnp.float32),
        grid_spec=pltpu.PrefetchScalarGridSpec(
            num_scalar_prefetch=0,
            grid=grid,
            in_specs=[
                pl.BlockSpec((bt, F), lambda i: (i, 0)),    # x tile (streamed)
                pl.BlockSpec((H, E), lambda i: (0, 0)),     # wj_eff (resident)
                pl.BlockSpec((1, E), lambda i: (0, 0)),     # bj
                pl.BlockSpec((H, E), lambda i: (0, 0)),     # wf_eff
                pl.BlockSpec((1, E), lambda i: (0, 0)),     # bf
                pl.BlockSpec((1, E), lambda i: (0, 0)),     # virtual-token row
            ],
            out_specs=pl.BlockSpec((bt, T * E), lambda i: (i, 0)),
        ),
        compiler_params=pltpu.CompilerParams(
            dimension_semantics=("parallel",)),
    )(xin, wj_eff, bj, wf_eff, bf, vt)

    return out2d.reshape(B, T, E)   # free view: final layout already correct


def init_params(key, hist_dim, n_embd):
    kj, kbj, kf, kbf, ke = jax.random.split(key, 5)
    lim = 1.0 / np.sqrt(hist_dim + 1)
    # nn.Linear(hist_dim+1, n_embd): weight stored pre-transposed as (in, out)
    wj = jax.random.uniform(kj, (hist_dim + 1, n_embd), jnp.float32, -lim, lim)
    bj = jax.random.uniform(kbj, (1, n_embd), jnp.float32, -lim, lim)
    wf = jax.random.uniform(kf, (hist_dim + 1, n_embd), jnp.float32, -lim, lim)
    bf = jax.random.uniform(kbf, (1, n_embd), jnp.float32, -lim, lim)
    # nn.Embedding(2, n_embd)
    emb = jax.random.normal(ke, (2, n_embd), jnp.float32)
    return dict(wj=wj, bj=bj, wf=wf, bf=bf, emb=emb)


def scale_embedding_ref(x, params, *, n_join_col, n_fanout, hist_dim):
    """Pure-JAX reference mirroring the PyTorch forward exactly (no folding)."""
    B = x.shape[0]
    outs = [jnp.broadcast_to(params['emb'][1][None, :], (B, params['emb'].shape[1]))]
    for i in range(n_join_col):
        s = x[:, i * hist_dim:(i + 1) * hist_dim]
        cat = jnp.concatenate([jnp.sum(s, axis=1, keepdims=True), s], axis=1)
        outs.append(cat @ params['wj'] + params['bj'])
    bias = n_join_col * hist_dim
    for i in range(n_fanout):
        s = x[:, bias + i * hist_dim:bias + (i + 1) * hist_dim]
        cat = jnp.concatenate([jnp.sum(s, axis=1, keepdims=True), s], axis=1)
        outs.append(cat @ params['wf'] + params['bf'])
    return jnp.stack(outs, axis=1)


if __name__ == "__main__":
    # --- small config (single grid step; blocks equal full array extents) ---
    n_join_col, n_fanout = 3, 2
    hist_dim, n_embd = 12, 128
    batch = 4

    key = jax.random.PRNGKey(0)
    kp, kx = jax.random.split(key)
    params = init_params(kp, hist_dim, n_embd)
    x = jax.random.normal(kx, (batch, (n_join_col + n_fanout) * hist_dim), jnp.float32)

    out = scale_embedding(x, params, n_join_col=n_join_col, n_fanout=n_fanout,
                          hist_dim=hist_dim, n_embd=n_embd)
    out = jax.block_until_ready(out)

    ref = scale_embedding_ref(x, params, n_join_col=n_join_col,
                              n_fanout=n_fanout, hist_dim=hist_dim)
    assert out.shape == (batch, 1 + n_join_col + n_fanout, n_embd)
    np.testing.assert_allclose(np.asarray(out), np.asarray(ref), rtol=1e-5, atol=1e-5)

    # --- larger config exercising the batch-tiled, pipelined grid path ---
    n_join_col2, n_fanout2 = 8, 8
    batch2 = 32
    kp2, kx2 = jax.random.split(jax.random.PRNGKey(1))
    params2 = init_params(kp2, hist_dim, n_embd)
    x2 = jax.random.normal(kx2, (batch2, (n_join_col2 + n_fanout2) * hist_dim),
                           jnp.float32)
    out2 = scale_embedding(x2, params2, n_join_col=n_join_col2, n_fanout=n_fanout2,
                           hist_dim=hist_dim, n_embd=n_embd, batch_tile=8)
    out2 = jax.block_until_ready(out2)
    ref2 = scale_embedding_ref(x2, params2, n_join_col=n_join_col2,
                               n_fanout=n_fanout2, hist_dim=hist_dim)
    np.testing.assert_allclose(np.asarray(out2), np.asarray(ref2),
                               rtol=1e-5, atol=1e-5)

    print("KERNEL_OK")
</pallas_src>

<mosaic_0001>
module attributes {stable_mosaic.version = 11 : i64} {
  func.func @_scale_embedding_kernel(%arg0: i32, %arg1: memref<4x60xf32, #tpu.memory_space<vmem>>, %arg2: memref<12x128xf32, #tpu.memory_space<vmem>>, %arg3: memref<1x128xf32, #tpu.memory_space<vmem>>, %arg4: memref<12x128xf32, #tpu.memory_space<vmem>>, %arg5: memref<1x128xf32, #tpu.memory_space<vmem>>, %arg6: memref<1x128xf32, #tpu.memory_space<vmem>>, %arg7: memref<4x768xf32, #tpu.memory_space<vmem>>) attributes {dimension_semantics = [#tpu.dimension_semantics<parallel>], iteration_bounds = array<i64: 1>, scalar_prefetch = 0 : i64, scratch_operands = 0 : i64, tpu.core_type = #tpu.core_type<tc>, window_params = [{transform_indices = @transform_0, window_bounds = array<i64: 4, 60>}, {pipeline_mode = #tpu.pipeline_mode<synchronous>, transform_indices = @transform_1, window_bounds = array<i64: 12, 128>}, {pipeline_mode = #tpu.pipeline_mode<synchronous>, transform_indices = @transform_2, window_bounds = array<i64: 1, 128>}, {pipeline_mode = #tpu.pipeline_mode<synchronous>, transform_indices = @transform_3, window_bounds = array<i64: 12, 128>}, {pipeline_mode = #tpu.pipeline_mode<synchronous>, transform_indices = @transform_4, window_bounds = array<i64: 1, 128>}, {pipeline_mode = #tpu.pipeline_mode<synchronous>, transform_indices = @transform_5, window_bounds = array<i64: 1, 128>}, {transform_indices = @transform_6, window_bounds = array<i64: 4, 768>}]} {
    %c0 = arith.constant 0 : index
    %c0_0 = arith.constant 0 : index
    %0 = vector.load %arg2[%c0, %c0_0] : memref<12x128xf32, #tpu.memory_space<vmem>>, vector<12x128xf32>
    %c0_1 = arith.constant 0 : index
    %c0_2 = arith.constant 0 : index
    %1 = vector.load %arg4[%c0_1, %c0_2] : memref<12x128xf32, #tpu.memory_space<vmem>>, vector<12x128xf32>
    %c0_3 = arith.constant 0 : index
    %c0_4 = arith.constant 0 : index
    %2 = vector.load %arg3[%c0_3, %c0_4] : memref<1x128xf32, #tpu.memory_space<vmem>>, vector<1x128xf32>
    %c0_5 = arith.constant 0 : index
    %c0_6 = arith.constant 0 : index
    %3 = vector.load %arg5[%c0_5, %c0_6] : memref<1x128xf32, #tpu.memory_space<vmem>>, vector<1x128xf32>
    %c0_7 = arith.constant 0 : index
    %c0_8 = arith.constant 0 : index
    %4 = vector.load %arg6[%c0_7, %c0_8] : memref<1x128xf32, #tpu.memory_space<vmem>>, vector<1x128xf32>
    %5 = vector.shape_cast %4 : vector<1x128xf32> to vector<1x128xf32>
    %6 = vector.broadcast %5 : vector<1x128xf32> to vector<4x128xf32>
    %c0_9 = arith.constant 0 : index
    %c0_10 = arith.constant 0 : index
    %7 = vector.load %arg7[%c0_9, %c0_10] : memref<4x768xf32, #tpu.memory_space<vmem>>, vector<4x128xf32>
    tpu.vector_store %arg7[%c0_9, %c0_10], %6 {strides = array<i32>} : memref<4x768xf32, #tpu.memory_space<vmem>>, vector<4x128xf32>,
    %c0_11 = arith.constant 0 : index
    %c0_12 = arith.constant 0 : index
    %8 = vector.load %arg1[%c0_11, %c0_12] : memref<4x60xf32, #tpu.memory_space<vmem>>, vector<4x12xf32>
    %cst = arith.constant dense<0.000000e+00> : vector<4x128xf32>
    %9 = tpu.matmul %8, %0, %cst {dimension_numbers = #tpu.dot_dimension_numbers<[1], [0], [0], [1], [0, 0, 1, 1], [], []>} : vector<4x12xf32>, vector<12x128xf32>, vector<4x128xf32> -> vector<4x128xf32>
    %10 = vector.broadcast %2 : vector<1x128xf32> to vector<4x128xf32>
    %11 = arith.addf %9, %10 : vector<4x128xf32>
    %c0_13 = arith.constant 0 : index
    %c128 = arith.constant 128 : index
    %12 = vector.load %arg7[%c0_13, %c128] : memref<4x768xf32, #tpu.memory_space<vmem>>, vector<4x128xf32>
    tpu.vector_store %arg7[%c0_13, %c128], %11 {strides = array<i32>} : memref<4x768xf32, #tpu.memory_space<vmem>>, vector<4x128xf32>,
    %c0_14 = arith.constant 0 : index
    %c12 = arith.constant 12 : index
    %13 = vector.load %arg1[%c0_14, %c12] : memref<4x60xf32, #tpu.memory_space<vmem>>, vector<4x12xf32>
    %cst_15 = arith.constant dense<0.000000e+00> : vector<4x128xf32>
    %14 = tpu.matmul %13, %0, %cst_15 {dimension_numbers = #tpu.dot_dimension_numbers<[1], [0], [0], [1], [0, 0, 1, 1], [], []>} : vector<4x12xf32>, vector<12x128xf32>, vector<4x128xf32> -> vector<4x128xf32>
    %15 = vector.broadcast %2 : vector<1x128xf32> to vector<4x128xf32>
    %16 = arith.addf %14, %15 : vector<4x128xf32>
    %c0_16 = arith.constant 0 : index
    %c256 = arith.constant 256 : index
    %17 = vector.load %arg7[%c0_16, %c256] : memref<4x768xf32, #tpu.memory_space<vmem>>, vector<4x128xf32>
    tpu.vector_store %arg7[%c0_16, %c256], %16 {strides = array<i32>} : memref<4x768xf32, #tpu.memory_space<vmem>>, vector<4x128xf32>,
    %c0_17 = arith.constant 0 : index
    %c24 = arith.constant 24 : index
    %18 = vector.load %arg1[%c0_17, %c24] : memref<4x60xf32, #tpu.memory_space<vmem>>, vector<4x12xf32>
    %cst_18 = arith.constant dense<0.000000e+00> : vector<4x128xf32>
    %19 = tpu.matmul %18, %0, %cst_18 {dimension_numbers = #tpu.dot_dimension_numbers<[1], [0], [0], [1], [0, 0, 1, 1], [], []>} : vector<4x12xf32>, vector<12x128xf32>, vector<4x128xf32> -> vector<4x128xf32>
    %20 = vector.broadcast %2 : vector<1x128xf32> to vector<4x128xf32>
    %21 = arith.addf %19, %20 : vector<4x128xf32>
    %c0_19 = arith.constant 0 : index
    %c384 = arith.constant 384 : index
    %22 = vector.load %arg7[%c0_19, %c384] : memref<4x768xf32, #tpu.memory_space<vmem>>, vector<4x128xf32>
    tpu.vector_store %arg7[%c0_19, %c384], %21 {strides = array<i32>} : memref<4x768xf32, #tpu.memory_space<vmem>>, vector<4x128xf32>,
    %c0_20 = arith.constant 0 : index
    %c36 = arith.constant 36 : index
    %23 = vector.load %arg1[%c0_20, %c36] : memref<4x60xf32, #tpu.memory_space<vmem>>, vector<4x12xf32>
    %cst_21 = arith.constant dense<0.000000e+00> : vector<4x128xf32>
    %24 = tpu.matmul %23, %1, %cst_21 {dimension_numbers = #tpu.dot_dimension_numbers<[1], [0], [0], [1], [0, 0, 1, 1], [], []>} : vector<4x12xf32>, vector<12x128xf32>, vector<4x128xf32> -> vector<4x128xf32>
    %25 = vector.broadcast %3 : vector<1x128xf32> to vector<4x128xf32>
    %26 = arith.addf %24, %25 : vector<4x128xf32>
    %c0_22 = arith.constant 0 : index
    %c512 = arith.constant 512 : index
    %27 = vector.load %arg7[%c0_22, %c512] : memref<4x768xf32, #tpu.memory_space<vmem>>, vector<4x128xf32>
    tpu.vector_store %arg7[%c0_22, %c512], %26 {strides = array<i32>} : memref<4x768xf32, #tpu.memory_space<vmem>>, vector<4x128xf32>,
    %c0_23 = arith.constant 0 : index
    %c48 = arith.constant 48 : index
    %28 = vector.load %arg1[%c0_23, %c48] : memref<4x60xf32, #tpu.memory_space<vmem>>, vector<4x12xf32>
    %cst_24 = arith.constant dense<0.000000e+00> : vector<4x128xf32>
    %29 = tpu.matmul %28, %1, %cst_24 {dimension_numbers = #tpu.dot_dimension_numbers<[1], [0], [0], [1], [0, 0, 1, 1], [], []>} : vector<4x12xf32>, vector<12x128xf32>, vector<4x128xf32> -> vector<4x128xf32>
    %30 = vector.broadcast %3 : vector<1x128xf32> to vector<4x128xf32>
    %31 = arith.addf %29, %30 : vector<4x128xf32>
    %c0_25 = arith.constant 0 : index
    %c640 = arith.constant 640 : index
    %32 = vector.load %arg7[%c0_25, %c640] : memref<4x768xf32, #tpu.memory_space<vmem>>, vector<4x128xf32>
    tpu.vector_store %arg7[%c0_25, %c640], %31 {strides = array<i32>} : memref<4x768xf32, #tpu.memory_space<vmem>>, vector<4x128xf32>,
    return
  }
  func.func @transform_0(%arg0: i32) -> (i32, i32) {
    %c0_i32 = arith.constant 0 : i32
    %c0_i32_0 = arith.constant 0 : i32
    return %arg0, %c0_i32 : i32, i32
  }
  func.func @transform_1(%arg0: i32) -> (i32, i32) {
    %c0_i32 = arith.constant 0 : i32
    %c0_i32_0 = arith.constant 0 : i32
    %c0_i32_1 = arith.constant 0 : i32
    return %c0_i32, %c0_i32_0 : i32, i32
  }
  func.func @transform_2(%arg0: i32) -> (i32, i32) {
    %c0_i32 = arith.constant 0 : i32
    %c0_i32_0 = arith.constant 0 : i32
    %c0_i32_1 = arith.constant 0 : i32
    return %c0_i32, %c0_i32_0 : i32, i32
  }
  func.func @transform_3(%arg0: i32) -> (i32, i32) {
    %c0_i32 = arith.constant 0 : i32
    %c0_i32_0 = arith.constant 0 : i32
    %c0_i32_1 = arith.constant 0 : i32
    return %c0_i32, %c0_i32_0 : i32, i32
  }
  func.func @transform_4(%arg0: i32) -> (i32, i32) {
    %c0_i32 = arith.constant 0 : i32
    %c0_i32_0 = arith.constant 0 : i32
    %c0_i32_1 = arith.constant 0 : i32
    return %c0_i32, %c0_i32_0 : i32, i32
  }
  func.func @transform_5(%arg0: i32) -> (i32, i32) {
    %c0_i32 = arith.constant 0 : i32
    %c0_i32_0 = arith.constant 0 : i32
    %c0_i32_1 = arith.constant 0 : i32
    return %c0_i32, %c0_i32_0 : i32, i32
  }
  func.func @transform_6(%arg0: i32) -> (i32, i32) {
    %c0_i32 = arith.constant 0 : i32
    %c0_i32_0 = arith.constant 0 : i32
    return %arg0, %c0_i32 : i32, i32
  }
}

</mosaic_0001>

<llo_original>
// kernel: tpu_custom_call.1
$region0: #{tpu_custom_call.1}
  #allocation0 [shape = 'u32[]', space=smem, size = 0x4, offset = 0x4, fixed_abs, tag = 'smem constant byte address 0x4 - core index']
  #allocation1 [shape = 'u32[72,128]{1,0:T(1,128)}', space=vmem, size = 0x9000, scoped, tag = 'internal scratch']
  %s0 = inlined_call_operand.hbm [shape: f32[4,60], index: 0, kind: input, shape index: {}]
  %s1 = inlined_call_operand.hbm [shape: f32[12,128], index: 1, kind: input, shape index: {}]
  %s2 = inlined_call_operand.vmem [shape: f32[1,128], index: 2, kind: input, shape index: {}]
  %s3 = inlined_call_operand.hbm [shape: f32[12,128], index: 3, kind: input, shape index: {}]
  %s4 = inlined_call_operand.vmem [shape: f32[1,128], index: 4, kind: input, shape index: {}]
  %s5 = inlined_call_operand.vmem [shape: f32[1,128], index: 5, kind: input, shape index: {}]
  %s6 = inlined_call_operand.hbm [shape: f32[4,768], index: 6, kind: output, shape index: {}]
  %s7 = sld [smem:[#allocation0]]
  $region46: #{tpu_custom_call.1} parent=0
    _
  %s9 = ssub.s32 1, %s7
  %s10 = scalar_select 0, %s9, %s7
  $region1: #{tpu_custom_call.1} parent=0
    #allocation2 [shape = 'u8[2048]{0}', space=vmem, size = 0x800, scoped, tag = 'input window, operand 0, single buffered']
    #allocation3 [shape = 's32[1]{0}', space=sflag, size = 0x4, scoped, tag = 'scoped memory for tpu_custom_call.1']
    #allocation4 [shape = 's32[1]{0}', space=sflag, size = 0x4, scoped, tag = 'scoped memory for tpu_custom_call.1']
    #allocation5 [shape = 'u8[8192]{0}', space=vmem, size = 0x2000, scoped, tag = 'input window, operand 1, single buffered']
    #allocation6 [shape = 's32[1]{0}', space=sflag, size = 0x4, scoped, tag = 'scoped memory for tpu_custom_call.1']
    #allocation7 [shape = 'u8[8192]{0}', space=vmem, size = 0x2000, scoped, tag = 'input window, operand 3, single buffered']
    #allocation8 [shape = 'u8[12288]{0}', space=vmem, size = 0x3000, scoped, tag = 'output window, operand 0, single buffered']
    %11 = vsyncpa [#allocation3], 0
    %12 = vsyncpa [#allocation6], 0
    %13 = vsyncpa [#allocation4], 0
    // Predicated region
    $region2: #{tpu_custom_call.1} parent=1 // pred_check
      _
    $region3: #{tpu_custom_call.1} parent=1 // pred_check_branch
      %15 = sbr.rel (0) target = $region5
    $region4: #{tpu_custom_call.1} parent=1 // pred_region
      %17 = vsyncadd [#allocation3], 0
      %s19 = sshll.u32 %s0, 4
      %s20 = int_to_ptr.hbm [resolvable:$true] %s19
      %s21 = sshll.u32 [#allocation2], 4
      %s22 = int_to_ptr.vmem [resolvable:$true] %s21
      %24 = dma.hbm_to_vmem [thread:$0]  %s20, 64, %s22, [#allocation3]
    $region5: #{tpu_custom_call.1} parent=1 // pred_fallthru
      _
    // Predicated region
    $region6: #{tpu_custom_call.1} parent=1 // pred_check
      _
    $region7: #{tpu_custom_call.1} parent=1 // pred_check_branch
      %26 = sbr.rel (0) target = $region9
    $region8: #{tpu_custom_call.1} parent=1 // pred_region
      %28 = vsyncadd [#allocation6], 0
      %s29 = sshll.u32 %s1, 4
      %s30 = int_to_ptr.hbm [resolvable:$true] %s29
      %s31 = sshll.u32 [#allocation5], 4
      %s32 = int_to_ptr.vmem [resolvable:$true] %s31
      %37 = dma.hbm_to_vmem [thread:$0]  %s30, 256, %s32, [#allocation6], 128, 128, 8
    $region9: #{tpu_custom_call.1} parent=1 // pred_fallthru
      _
    // Predicated region
    $region10: #{tpu_custom_call.1} parent=1 // pred_check
      _
    $region11: #{tpu_custom_call.1} parent=1 // pred_check_branch
      %39 = sbr.rel (0) target = $region13
    $region12: #{tpu_custom_call.1} parent=1 // pred_region
      _
    $region13: #{tpu_custom_call.1} parent=1 // pred_fallthru
      _
    // Predicated region
    $region14: #{tpu_custom_call.1} parent=1 // pred_check
      _
    $region15: #{tpu_custom_call.1} parent=1 // pred_check_branch
      %41 = sbr.rel (0) target = $region17
    $region16: #{tpu_custom_call.1} parent=1 // pred_region
      %43 = vsyncadd [#allocation6], 0
      %s44 = sshll.u32 %s3, 4
      %s45 = int_to_ptr.hbm [resolvable:$true] %s44
      %s46 = sshll.u32 [#allocation7], 4
      %s47 = int_to_ptr.vmem [resolvable:$true] %s46
      %52 = dma.hbm_to_vmem [thread:$0]  %s45, 256, %s47, [#allocation6], 128, 128, 8
    $region17: #{tpu_custom_call.1} parent=1 // pred_fallthru
      _
    // Predicated region
    $region18: #{tpu_custom_call.1} parent=1 // pred_check
      _
    $region19: #{tpu_custom_call.1} parent=1 // pred_check_branch
      %54 = sbr.rel (0) target = $region21
    $region20: #{tpu_custom_call.1} parent=1 // pred_region
      _
    $region21: #{tpu_custom_call.1} parent=1 // pred_fallthru
      _
    // Predicated region
    $region22: #{tpu_custom_call.1} parent=1 // pred_check
      _
    $region23: #{tpu_custom_call.1} parent=1 // pred_check_branch
      %56 = sbr.rel (0) target = $region25
    $region24: #{tpu_custom_call.1} parent=1 // pred_region
      _
    $region25: #{tpu_custom_call.1} parent=1 // pred_fallthru
      _
    // Predicated region
    $region26: #{tpu_custom_call.1} parent=1 // pred_check
      _
    $region27: #{tpu_custom_call.1} parent=1 // pred_check_branch
      %58 = sbr.rel (0) target = $region29
    $region28: #{tpu_custom_call.1} parent=1 // pred_region
      %60 = dma.done [#allocation3], 64
    $region29: #{tpu_custom_call.1} parent=1 // pred_fallthru
      _
    // Predicated region
    $region30: #{tpu_custom_call.1} parent=1 // pred_check
      _
    $region31: #{tpu_custom_call.1} parent=1 // pred_check_branch
      %62 = sbr.rel (0) target = $region33
    $region32: #{tpu_custom_call.1} parent=1 // pred_region
      %64 = dma.done [#allocation6], 256
    $region33: #{tpu_custom_call.1} parent=1 // pred_fallthru
      _
    // Predicated region
    $region34: #{tpu_custom_call.1} parent=1 // pred_check
      _
    $region35: #{tpu_custom_call.1} parent=1 // pred_check_branch
      %66 = sbr.rel (0) target = $region37
    $region36: #{tpu_custom_call.1} parent=1 // pred_region
      %68 = dma.done [#allocation6], 256
    $region37: #{tpu_custom_call.1} parent=1 // pred_fallthru
      _
    %v69 = vld [vmem:[#allocation5] sm:$0xff]
    %v70 = vld [vmem:[#allocation5 + $0x8] sm:$0xf]
    %v71 = vld [vmem:[#allocation7] sm:$0xff]
    %v72 = vld [vmem:[#allocation7 + $0x8] sm:$0xf]
    %v73 = vld [vmem:[%s2] sm:$0x1]
    %v74 = vld [vmem:[%s4] sm:$0x1]
    %v75 = vld [vmem:[%s5] sm:$0x1]
    %v77 = vperm.slane %v75, 0
    %79 = vst [vmem:[#allocation8] sm:$0xf] %v77
    %v80 = vld [vmem:[#allocation2] sm:$0xf]
    %v82 = vperm.slane %v73, 0
    %vm84 = vcmask 97280
    %v86 = vsel %vm84, %v80, 0
    %vm88 = vcmask 1043456
    %v90 = vsel %vm88, %v70, 0
    %92 = vmatpush.msra.mxu0 0.0
    %93 = vmatpush.msra.mxu0 0.0
    %94 = vmatpush.msra.mxu0 0.0
    %95 = vmatpush.msra.mxu0 0.0
    %96 = vmatpush.msra.mxu0 0.0
    %97 = vmatpush.msra.mxu0 0.0
    %98 = vmatpush.msra.mxu0 0.0
    %99 = vmatpush.msra.mxu0 0.0
    %100 = vmatpush.msra.mxu0 0.0
    %101 = vmatpush.msra.mxu0 0.0
    %102 = vmatpush.msra.mxu0 0.0
    %103 = vmatpush.msra.mxu0 0.0
    %104 = vmatpush.msra.mxu0 0.0
    %105 = vmatpush.msra.mxu0 0.0
    %106 = vmatpush.msra.mxu0 %v90
    %107 = vmatpush.msra.mxu0 %v69
    %108 = vmatmul.f32.gmra.mxu0 %v86
    %v109 = vpop.f32.mrf.mxu0
    %v110 = vadd.f32 %v82, %v109
    %111 = vdwg.mxu0
    %112 = vst [vmem:[#allocation8 + $0x4] sm:$0xf] %v110
    %v113 = vld [vmem:[#allocation2] sm:$0xf]
    %115 = vrot.lane.b32.xlu0 %v113, 116
    %v116 = vpop.permute.xlu0 %115
    %v117 = vsel %vm84, %v116, 0
    %119 = vmatpush.msra.mxu0 0.0
    %120 = vmatpush.msra.mxu0 0.0
    %121 = vmatpush.msra.mxu0 0.0
    %122 = vmatpush.msra.mxu0 0.0
    %123 = vmatpush.msra.mxu0 0.0
    %124 = vmatpush.msra.mxu0 0.0
    %125 = vmatpush.msra.mxu0 0.0
    %126 = vmatpush.msra.mxu0 0.0
    %127 = vmatpush.msra.mxu0 0.0
    %128 = vmatpush.msra.mxu0 0.0
    %129 = vmatpush.msra.mxu0 0.0
    %130 = vmatpush.msra.mxu0 0.0
    %131 = vmatpush.msra.mxu0 0.0
    %132 = vmatpush.msra.mxu0 0.0
    %133 = vmatpush.msra.mxu0 %v90
    %134 = vmatpush.msra.mxu0 %v69
    %135 = vmatmul.f32.gmra.mxu0 %v117
    %v136 = vpop.f32.mrf.mxu0
    %v137 = vadd.f32 %v82, %v136
    %138 = vdwg.mxu0
    %139 = vst [vmem:[#allocation8 + $0x8] sm:$0xf] %v137
    %v140 = vld [vmem:[#allocation2] sm:$0xf]
    %142 = vrot.lane.b32.xlu0 %v140, 104
    %v143 = vpop.permute.xlu0 %142
    %v144 = vsel %vm84, %v143, 0
    %146 = vmatpush.msra.mxu0 0.0
    %147 = vmatpush.msra.mxu0 0.0
    %148 = vmatpush.msra.mxu0 0.0
    %149 = vmatpush.msra.mxu0 0.0
    %150 = vmatpush.msra.mxu0 0.0
    %151 = vmatpush.msra.mxu0 0.0
    %152 = vmatpush.msra.mxu0 0.0
    %153 = vmatpush.msra.mxu0 0.0
    %154 = vmatpush.msra.mxu0 0.0
    %155 = vmatpush.msra.mxu0 0.0
    %156 = vmatpush.msra.mxu0 0.0
    %157 = vmatpush.msra.mxu0 0.0
    %158 = vmatpush.msra.mxu0 0.0
    %159 = vmatpush.msra.mxu0 0.0
    %160 = vmatpush.msra.mxu0 %v90
    %161 = vmatpush.msra.mxu0 %v69
    %162 = vmatmul.f32.gmra.mxu0 %v144
    %v163 = vpop.f32.mrf.mxu0
    %v164 = vadd.f32 %v82, %v163
    %165 = vdwg.mxu0
    %166 = vst [vmem:[#allocation8 + $0xc] sm:$0xf] %v164
    %v167 = vld [vmem:[#allocation2] sm:$0xf]
    %v169 = vperm.slane %v74, 0
    %172 = vrot.lane.b32.xlu0 %v167, 92
    %v173 = vpop.permute.xlu0 %172
    %v174 = vsel %vm84, %v173, 0
    %v177 = vsel %vm88, %v72, 0
    %179 = vmatpush.msra.mxu0 0.0
    %180 = vmatpush.msra.mxu0 0.0
    %181 = vmatpush.msra.mxu0 0.0
    %182 = vmatpush.msra.mxu0 0.0
    %183 = vmatpush.msra.mxu0 0.0
    %184 = vmatpush.msra.mxu0 0.0
    %185 = vmatpush.msra.mxu0 0.0
    %186 = vmatpush.msra.mxu0 0.0
    %187 = vmatpush.msra.mxu0 0.0
    %188 = vmatpush.msra.mxu0 0.0
    %189 = vmatpush.msra.mxu0 0.0
    %190 = vmatpush.msra.mxu0 0.0
    %191 = vmatpush.msra.mxu0 0.0
    %192 = vmatpush.msra.mxu0 0.0
    %193 = vmatpush.msra.mxu0 %v177
    %194 = vmatpush.msra.mxu0 %v71
    %195 = vmatmul.f32.gmra.mxu0 %v174
    %v196 = vpop.f32.mrf.mxu0
    %v197 = vadd.f32 %v169, %v196
    %198 = vdwg.mxu0
    %199 = vst [vmem:[#allocation8 + $0x10] sm:$0xf] %v197
    %v200 = vld [vmem:[#allocation2] sm:$0xf]
    %202 = vrot.lane.b32.xlu0 %v200, 80
    %v203 = vpop.permute.xlu0 %202
    %v204 = vsel %vm84, %v203, 0
    %206 = vmatpush.msra.mxu0 0.0
    %207 = vmatpush.msra.mxu0 0.0
    %208 = vmatpush.msra.mxu0 0.0
    %209 = vmatpush.msra.mxu0 0.0
    %210 = vmatpush.msra.mxu0 0.0
    %211 = vmatpush.msra.mxu0 0.0
    %212 = vmatpush.msra.mxu0 0.0
    %213 = vmatpush.msra.mxu0 0.0
    %214 = vmatpush.msra.mxu0 0.0
    %215 = vmatpush.msra.mxu0 0.0
    %216 = vmatpush.msra.mxu0 0.0
    %217 = vmatpush.msra.mxu0 0.0
    %218 = vmatpush.msra.mxu0 0.0
    %219 = vmatpush.msra.mxu0 0.0
    %220 = vmatpush.msra.mxu0 %v177
    %221 = vmatpush.msra.mxu0 %v71
    %222 = vmatmul.f32.gmra.mxu0 %v204
    %v223 = vpop.f32.mrf.mxu0
    %v224 = vadd.f32 %v169, %v223
    %225 = vdwg.mxu0
    %226 = vst [vmem:[#allocation8 + $0x14] sm:$0xf] %v224
    // Predicated region
    $region38: #{tpu_custom_call.1} parent=1 // pred_check
      _
    $region39: #{tpu_custom_call.1} parent=1 // pred_check_branch
      %228 = sbr.rel (0) target = $region41
    $region40: #{tpu_custom_call.1} parent=1 // pred_region
      %230 = vsyncadd [#allocation4], 0
      %s232 = sshll.u32 [#allocation8], 4
      %s233 = int_to_ptr.vmem [resolvable:$true] %s232
      %s234 = sshll.u32 %s6, 4
      %s235 = int_to_ptr.hbm [resolvable:$true] %s234
      %237 = dma.vmem_to_hbm [thread:$0]  %s233, 384, %s235, [#allocation4]
    $region41: #{tpu_custom_call.1} parent=1 // pred_fallthru
      _
    // Predicated region
    $region42: #{tpu_custom_call.1} parent=1 // pred_check
      _
    $region43: #{tpu_custom_call.1} parent=1 // pred_check_branch
      %239 = sbr.rel (0) target = $region45
    $region44: #{tpu_custom_call.1} parent=1 // pred_region
      %241 = dma.done [#allocation4], 384
    $region45: #{tpu_custom_call.1} parent=1 // pred_fallthru
      _
    %242 = vsyncpa [#allocation3], 1
    %243 = vsyncpa [#allocation6], 1
    %244 = vsyncpa [#allocation4], 1

</llo_original>
